<compile_context>
chip_gen: v5e
topology: v5e:2x2
jax: 0.10.0
libtpu: 0.0.40
codegen_flags: <defaults>
</compile_context>

<pallas_src>
import functools
import math

import jax
import jax.numpy as jnp
from jax.experimental import pallas as pl
from jax.experimental.pallas import tpu as pltpu


def _ntxent_den_kernel(zr_ref, zc_ref, o_ref, den_acc, *, den_const, acc_w):
    """Accumulate row sums of exp(sim/temp); emit per-row log(den) at the end."""
    k = pl.program_id(1)                     # column-tile index (reduction axis)

    @pl.when(k == 0)
    def _init():
        den_acc[...] = jnp.zeros_like(den_acc)

    # (tm, D) x (tk, D) contracted on D -> (tm, tk) = sim / temp for this tile
    # (sqrt(1/temp) is already folded into both operands in the wrapper).
    sim_s = jax.lax.dot_general(
        zr_ref[...], zc_ref[...], (((1,), (1,)), ((), ())),
        preferred_element_type=jnp.float32)

    # TODO(synk): no log-sum-exp shift -- same f32 overflow behavior as the
    # PyTorch forward (only an issue for temp < ~0.012).
    e = jnp.exp(sim_s)                       # EUP slot

    # Lane-dense accumulation: cheap VALU adds of lane-aligned chunks; the
    # single cross-lane (XLU) reduction happens once per row tile in finalize.
    tk = e.shape[1]
    acc = den_acc[...]
    for c in range(tk // acc_w):
        acc = acc + e[:, c * acc_w:(c + 1) * acc_w]
    den_acc[...] = acc

    @pl.when(k == pl.num_programs(1) - 1)
    def _finalize():
        den = jnp.sum(den_acc[...], axis=-1, keepdims=True) - den_const
        o_ref[...] = jnp.log(den)


def _round_up(x: int, m: int) -> int:
    return ((x + m - 1) // m) * m


def _pick_div_tile(n: int, target: int) -> int:
    """Largest multiple-of-8 divisor of n that is <= target (n multiple of 8)."""
    t = min(target - target % 8, n)
    while t >= 8:
        if n % t == 0:
            return t
        t -= 8
    return n


def ntxent_loss(z1, z2, temp: float, *, row_tile: int = 256, col_tile: int = 512,
                matmul_dtype=jnp.bfloat16):
    """Pallas implementation of NTXent_Loss(batch_size=B, temp).forward(z1, z2)."""
    B, D = z1.shape
    assert z2.shape == (B, D)
    n = 2 * B
    eps = jnp.float32(1e-8)
    itemsize = jnp.dtype(matmul_dtype).itemsize

    # ---- O(B*D) prework in the wrapper (single fused XLA pass, f32) --------
    z1f = z1.astype(jnp.float32)
    z2f = z2.astype(jnp.float32)
    z_all = jnp.concatenate([z1f, z2f], axis=0)                         # (2B, D)

    # Row-wise L2 normalization; sqrt(1/temp) folded into both halves (the same
    # array feeds both matmul operands), stored in matmul_dtype for streaming.
    norm = jnp.sqrt(jnp.sum(z_all * z_all, axis=-1, keepdims=True))
    z_n = (z_all / jnp.maximum(norm, eps)) * jnp.float32(math.sqrt(1.0 / temp))
    z_n = z_n.astype(matmul_dtype)

    # Positive-pair cosine term in f32 (reference clamp form: max(|a||b|, eps)).
    pos_num = jnp.sum(z1f * z2f, axis=-1)
    pos_den = jnp.sqrt(jnp.sum(z1f * z1f, axis=-1)) * jnp.sqrt(jnp.sum(z2f * z2f, axis=-1))
    pos = pos_num / jnp.maximum(pos_den, eps)                           # (B,)

    # ---- tile selection -----------------------------------------------------
    # Keep the double-buffered tiles comfortably inside v7x's 32 MiB scoped
    # VMEM default; v5e/v6e (128 MiB) have plenty of headroom.
    budget = 24 * 1024 * 1024

    def vmem_est(tm_, tk_):
        return (2 * (tm_ + tk_) * D * itemsize     # double-buffered operand tiles
                + 2 * tm_ * tk_ * 4                # f32 sim + exp intermediates
                + tm_ * 128 * 4 + 2 * tm_ * 4)     # accumulator + output

    while vmem_est(row_tile, col_tile) > budget and col_tile > 128:
        col_tile //= 2
    while vmem_est(row_tile, col_tile) > budget and row_tile > 128:
        row_tile //= 2

    tm = min(row_tile, _round_up(n, 8))
    tm = max(8, tm - tm % 8)
    # Prefer >= 2 row tiles so v7x's two TensorCores both get work (only
    # triggered when it does not increase padding).
    if _round_up(n, tm) // tm < 2 and tm >= 16 and tm % 16 == 0:
        tm //= 2
    n_pad = _round_up(n, tm)
    pad = n_pad - n
    if pad:
        z_n = jnp.pad(z_n, ((0, pad), (0, 0)))
    tk = _pick_div_tile(n_pad, max(col_tile, tm))
    acc_w = math.gcd(tk, 128)
    nr, nc = n_pad // tm, n_pad // tk

    kernel = functools.partial(
        _ntxent_den_kernel,
        # exp(1/temp) self-similarity plus one exp(0)=1 per zero-padded column.
        den_const=float(math.exp(1.0 / temp) + pad),
        acc_w=acc_w)

    cost = pl.CostEstimate(
        flops=2 * n_pad * n_pad * D,
        transcendentals=n_pad * n_pad + n_pad,
        bytes_accessed=(nr + 1) * n_pad * D * itemsize + n_pad * 4)

    log_den = pl.pallas_call(
        kernel,
        out_shape=jax.ShapeDtypeStruct((n_pad, 1), jnp.float32),
        grid_spec=pltpu.PrefetchScalarGridSpec(
            num_scalar_prefetch=0,
            grid=(nr, nc),
            in_specs=[
                pl.BlockSpec((tm, D), lambda i, k: (i, 0)),   # resident row tile
                pl.BlockSpec((tk, D), lambda i, k: (k, 0)),   # streamed column tile
            ],
            out_specs=pl.BlockSpec((tm, 1), lambda i, k: (i, 0)),
            scratch_shapes=[pltpu.VMEM((tm, acc_w), jnp.float32)],
        ),
        compiler_params=pltpu.CompilerParams(
            dimension_semantics=("parallel", "arbitrary")),
        cost_estimate=cost,
    )(z_n, z_n)

    # Final tiny reductions in the wrapper (padded rows sliced off).
    return (jnp.sum(log_den[:n, 0]) - 2.0 * jnp.sum(pos) / temp) / n


def ntxent_loss_ref(z1, z2, temp: float):
    """Pure-JAX replica of the PyTorch forward (for verification)."""
    B = z1.shape[0]
    eps = 1e-8

    def cos(a, b):
        num = jnp.sum(a * b, axis=-1)
        na = jnp.sqrt(jnp.sum(a * a, axis=-1))
        nb = jnp.sqrt(jnp.sum(b * b, axis=-1))
        return num / jnp.maximum(na * nb, eps)

    z_all = jnp.concatenate([z1, z2], axis=0)
    sim_mat = cos(z_all[None, :, :], z_all[:, None, :])          # (2B, 2B)
    pos = cos(z1, z2)                                            # (B,)
    pos_pairs = jnp.exp(pos / temp)
    numerator = jnp.stack([pos_pairs, pos_pairs], axis=0).T.reshape(-1)
    denom = jnp.sum(jnp.exp(sim_mat / temp), axis=-1) - jnp.exp(1.0 / temp)
    return jnp.sum(-jnp.log(numerator / denom)) / (2 * B)


if __name__ == "__main__":
    temp = 0.5
    key = jax.random.PRNGKey(0)
    k1, k2, k3, k4 = jax.random.split(key, 4)

    # Small config consistent with the module: batch=8, hidden=32.
    z1 = jax.random.normal(k1, (8, 32), dtype=jnp.float32)
    z2 = jax.random.normal(k2, (8, 32), dtype=jnp.float32)
    ref = jax.block_until_ready(ntxent_loss_ref(z1, z2, temp))

    # f32 MXU operands (tight tolerance).
    loss_f32 = jax.block_until_ready(
        jax.jit(lambda a, b: ntxent_loss(a, b, temp, matmul_dtype=jnp.float32))(z1, z2))
    assert jnp.allclose(loss_f32, ref, rtol=1e-3, atol=1e-4), (loss_f32, ref)

    # Default bf16 MXU operands (f32 accumulation; looser tolerance).
    loss_bf16 = jax.block_until_ready(
        jax.jit(lambda a, b: ntxent_loss(a, b, temp))(z1, z2))
    assert jnp.allclose(loss_bf16, ref, rtol=2e-2, atol=2e-2), (loss_bf16, ref)

    # Multi-tile grid (exercises the streamed/accumulated denominator path).
    z1b = jax.random.normal(k3, (32, 128), dtype=jnp.float32)
    z2b = jax.random.normal(k4, (32, 128), dtype=jnp.float32)
    ref_b = jax.block_until_ready(ntxent_loss_ref(z1b, z2b, temp))
    loss_tiled = jax.block_until_ready(
        jax.jit(lambda a, b: ntxent_loss(a, b, temp, row_tile=16, col_tile=32,
                                         matmul_dtype=jnp.float32))(z1b, z2b))
    assert jnp.allclose(loss_tiled, ref_b, rtol=1e-3, atol=1e-4), (loss_tiled, ref_b)

    # Non-divisible batch -> exercises the zero-padding path (2B = 28 -> padded).
    z1c = jax.random.normal(k3, (14, 32), dtype=jnp.float32)
    z2c = jax.random.normal(k4, (14, 32), dtype=jnp.float32)
    ref_c = jax.block_until_ready(ntxent_loss_ref(z1c, z2c, temp))
    loss_pad = jax.block_until_ready(
        jax.jit(lambda a, b: ntxent_loss(a, b, temp, row_tile=16, col_tile=16,
                                         matmul_dtype=jnp.float32))(z1c, z2c))
    assert jnp.allclose(loss_pad, ref_c, rtol=1e-3, atol=1e-4), (loss_pad, ref_c)

    print("KERNEL_OK")
</pallas_src>

<mosaic_0001>
module attributes {stable_mosaic.version = 11 : i64} {
  func.func @_ntxent_den_kernel(%arg0: i32, %arg1: i32, %arg2: memref<8x32xf32, #tpu.memory_space<vmem>>, %arg3: memref<16x32xf32, #tpu.memory_space<vmem>>, %arg4: memref<8x1xf32, #tpu.memory_space<vmem>>, %arg5: memref<8x16xf32, #tpu.memory_space<vmem>>) attributes {dimension_semantics = [#tpu.dimension_semantics<parallel>, #tpu.dimension_semantics<arbitrary>], iteration_bounds = array<i64: 2, 1>, scalar_prefetch = 0 : i64, scratch_operands = 1 : i64, tpu.core_type = #tpu.core_type<tc>, window_params = [{transform_indices = @transform_0, window_bounds = array<i64: 8, 32>}, {transform_indices = @transform_1, window_bounds = array<i64: 16, 32>}, {transform_indices = @transform_2, window_bounds = array<i64: 8, 1>}]} {
    %c0_i32 = arith.constant 0 : i32
    %0 = arith.cmpi eq, %arg1, %c0_i32 : i32
    %1 = arith.extui %0 : i1 to i32
    %c0_i32_0 = arith.constant 0 : i32
    %2 = arith.cmpi ne, %1, %c0_i32_0 : i32
    scf.if %2 {
      %cst_10 = arith.constant 0.000000e+00 : f32
      %13 = vector.broadcast %cst_10 : f32 to vector<8x16xf32>
      %c0_11 = arith.constant 0 : index
      %c0_12 = arith.constant 0 : index
      %14 = vector.load %arg5[%c0_11, %c0_12] : memref<8x16xf32, #tpu.memory_space<vmem>>, vector<8x16xf32>
      tpu.vector_store %arg5[%c0_11, %c0_12], %13 {strides = array<i32>} : memref<8x16xf32, #tpu.memory_space<vmem>>, vector<8x16xf32>,
    } else {
    }
    %c0 = arith.constant 0 : index
    %c0_1 = arith.constant 0 : index
    %3 = vector.load %arg2[%c0, %c0_1] : memref<8x32xf32, #tpu.memory_space<vmem>>, vector<8x32xf32>
    %c0_2 = arith.constant 0 : index
    %c0_3 = arith.constant 0 : index
    %4 = vector.load %arg3[%c0_2, %c0_3] : memref<16x32xf32, #tpu.memory_space<vmem>>, vector<16x32xf32>
    %cst = arith.constant dense<0.000000e+00> : vector<8x16xf32>
    %5 = tpu.matmul %3, %4, %cst {dimension_numbers = #tpu.dot_dimension_numbers<[1], [1], [0], [0], [0, 0, 1, 0], [], []>} : vector<8x32xf32>, vector<16x32xf32>, vector<8x16xf32> -> vector<8x16xf32>
    %6 = math.exp %5 : vector<8x16xf32>
    %c0_4 = arith.constant 0 : index
    %c0_5 = arith.constant 0 : index
    %7 = vector.load %arg5[%c0_4, %c0_5] : memref<8x16xf32, #tpu.memory_space<vmem>>, vector<8x16xf32>
    %8 = arith.addf %7, %6 : vector<8x16xf32>
    %c0_6 = arith.constant 0 : index
    %c0_7 = arith.constant 0 : index
    %9 = vector.load %arg5[%c0_6, %c0_7] : memref<8x16xf32, #tpu.memory_space<vmem>>, vector<8x16xf32>
    tpu.vector_store %arg5[%c0_6, %c0_7], %8 {strides = array<i32>} : memref<8x16xf32, #tpu.memory_space<vmem>>, vector<8x16xf32>,
    %c0_i32_8 = arith.constant 0 : i32
    %10 = arith.cmpi eq, %arg1, %c0_i32_8 : i32
    %11 = arith.extui %10 : i1 to i32
    %c0_i32_9 = arith.constant 0 : i32
    %12 = arith.cmpi ne, %11, %c0_i32_9 : i32
    scf.if %12 {
      %c0_10 = arith.constant 0 : index
      %c0_11 = arith.constant 0 : index
      %13 = vector.load %arg5[%c0_10, %c0_11] : memref<8x16xf32, #tpu.memory_space<vmem>>, vector<8x16xf32>
      %cst_12 = arith.constant dense<0.000000e+00> : vector<8xf32>
      %14 = vector.multi_reduction <add>, %13, %cst_12 [1] : vector<8x16xf32> to vector<8xf32>
      %15 = vector.shape_cast %14 : vector<8xf32> to vector<8x1xf32>
      %cst_13 = arith.constant 7.3890562 : f32
      %16 = vector.broadcast %cst_13 : f32 to vector<8x1xf32>
      %17 = arith.subf %15, %16 : vector<8x1xf32>
      %18 = math.log %17 : vector<8x1xf32>
      %c0_14 = arith.constant 0 : index
      %c0_15 = arith.constant 0 : index
      %19 = vector.load %arg4[%c0_14, %c0_15] : memref<8x1xf32, #tpu.memory_space<vmem>>, vector<8x1xf32>
      tpu.vector_store %arg4[%c0_14, %c0_15], %18 {strides = array<i32>} : memref<8x1xf32, #tpu.memory_space<vmem>>, vector<8x1xf32>,
    } else {
    }
    return
  }
  func.func @transform_0(%arg0: i32, %arg1: i32) -> (i32, i32) {
    %c0_i32 = arith.constant 0 : i32
    %c0_i32_0 = arith.constant 0 : i32
    return %arg0, %c0_i32 : i32, i32
  }
  func.func @transform_1(%arg0: i32, %arg1: i32) -> (i32, i32) {
    %c0_i32 = arith.constant 0 : i32
    %c0_i32_0 = arith.constant 0 : i32
    return %arg1, %c0_i32 : i32, i32
  }
  func.func @transform_2(%arg0: i32, %arg1: i32) -> (i32, i32) {
    %c0_i32 = arith.constant 0 : i32
    %c0_i32_0 = arith.constant 0 : i32
    return %arg0, %c0_i32 : i32, i32
  }
}

</mosaic_0001>

<llo_original>
// kernel: _lambda_.1
$region0: #{_lambda_.1}
  #allocation0 [shape = 'u32[]', space=smem, size = 0x4, offset = 0x4, fixed_abs, tag = 'smem constant byte address 0x4 - core index']
  #allocation1 [shape = 'u32[72,128]{1,0:T(1,128)}', space=vmem, size = 0x9000, scoped, tag = 'internal scratch']
  #allocation2 [shape = 'f32[8,16]{1,0:T(8,128)}', space=vmem, size = 0x1000, scoped, tag = 'scratch operand']
  %s0 = inlined_call_operand.vmem [shape: f32[16,32], index: 0, kind: input, shape index: {}, may-alias: {0,1}]
  %s1 = inlined_call_operand.vmem [shape: f32[16,32], index: 1, kind: input, shape index: {}, may-alias: {0,1}]
  %s2 = inlined_call_operand.vmem [shape: f32[16,1], index: 2, kind: output, shape index: {}]
  %s3 = sld [smem:[#allocation0]]
  $region49: #{_lambda_.1} parent=0
    _
  %s5 = ssub.s32 1, %s3
  %s6 = scalar_select 0, %s5, %s3
  loop: start=0, step=1, limit=4
  $region2: #{_lambda_.1} parent=0 // loop_pre_header
    _
  $region3: #{_lambda_.1} parent=0 // loop_header
    %s8 = sphi 0, %s12
    %p9 = scmp.ge.s32.totalorder %s8, 4
    %s15 = sphi 0, %s27
    %s16 = sphi 0, %s23
    %s17 = sphi 0, %s15
    %s18 = sphi 0, %s16
    %s19 = sphi 0, %s17
    %s20 = sphi 0, %s18
    %s30 = sphi 0, %s32
    %s33 = sphi 0, %s30
    %s34 = sphi 0, %s33
    %s50 = sphi 0, %s34
    %s56 = sphi 0, %s58
    %s59 = sphi 0, %s56
    %s60 = sphi 0, %s59
    %s76 = sphi 0, %s60
    %s82 = sphi 0, %s84
    %s85 = sphi 0, %s82
    %s86 = sphi 0, %s85
    %s102 = sphi 0, %s86
  $region4: #{_lambda_.1} parent=0 // loop_header_branch
    %11 = sbr.rel (%p9) target = $region8
  $region5: #{_lambda_.1} parent=0 // loop_body
    %s13 = ssub.s32 %s8, 1
    %s14 = ssub.s32 %s8, 2
    %s21 = sadd.s32 1, %s16
    %p22 = scmp.ge.s32.totalorder %s21, 1
    %s23 = scalar_select %p22, 0, %s21
    %s24 = sadd.s32 1, %s15
    %s25 = scalar_select %p22, %s24, %s15
    %p26 = scmp.ge.s32.totalorder %s25, 2
    %s27 = scalar_select %p26, 0, %s25
    %s28 = ssub.s32 %s15, %s27
    %p29 = scmp.eq.s32.totalorder %s28, 0
    %s31 = sadd.s32 %s30, 1
    %s32 = scalar_select %p29, %s30, %s31
    %p35 = pneg %p29
    %p36 = scmp.eq.s32.totalorder %s8, 1
    %p37 = por %p35, %p36
    %p38 = scmp.ne.s32.totalorder %s30, %s33
    %p39 = scmp.eq.s32.totalorder %s8, 0
    %p40 = por %p38, %p39
    %p41 = scmp.ne.s32.totalorder %s30, %s33
    %p42 = scmp.eq.s32.totalorder %s13, 1
    %p43 = por %p41, %p42
    %p44 = scmp.ne.s32.totalorder %s33, %s34
    %p45 = scmp.eq.s32.totalorder %s13, 0
    %p46 = por %p44, %p45
    %p47 = scmp.ne.s32.totalorder %s33, %s34
    %p48 = scmp.eq.s32.totalorder %s14, 1
    %p49 = por %p47, %p48
    %p51 = scmp.ne.s32.totalorder %s34, %s50
    %p52 = scmp.eq.s32.totalorder %s14, 0
    %p53 = por %p51, %p52
    %s54 = ssub.s32 %s16, %s23
    %p55 = scmp.eq.s32.totalorder %s54, 0
    %s57 = sadd.s32 %s56, 1
    %s58 = scalar_select %p55, %s56, %s57
    %p61 = pneg %p55
    %p62 = scmp.eq.s32.totalorder %s8, 1
    %p63 = por %p61, %p62
    %p64 = scmp.ne.s32.totalorder %s56, %s59
    %p65 = scmp.eq.s32.totalorder %s8, 0
    %p66 = por %p64, %p65
    %p67 = scmp.ne.s32.totalorder %s56, %s59
    %p68 = scmp.eq.s32.totalorder %s13, 1
    %p69 = por %p67, %p68
    %p70 = scmp.ne.s32.totalorder %s59, %s60
    %p71 = scmp.eq.s32.totalorder %s13, 0
    %p72 = por %p70, %p71
    %p73 = scmp.ne.s32.totalorder %s59, %s60
    %p74 = scmp.eq.s32.totalorder %s14, 1
    %p75 = por %p73, %p74
    %p77 = scmp.ne.s32.totalorder %s60, %s76
    %p78 = scmp.eq.s32.totalorder %s14, 0
    %p79 = por %p77, %p78
    %s80 = ssub.s32 %s15, %s27
    %p81 = scmp.eq.s32.totalorder %s80, 0
    %s83 = sadd.s32 %s82, 1
    %s84 = scalar_select %p81, %s82, %s83
    %p87 = pneg %p81
    %p88 = scmp.eq.s32.totalorder %s8, 1
    %p89 = por %p87, %p88
    %p90 = scmp.ne.s32.totalorder %s82, %s85
    %p91 = scmp.eq.s32.totalorder %s8, 0
    %p92 = por %p90, %p91
    %p93 = scmp.ne.s32.totalorder %s82, %s85
    %p94 = scmp.eq.s32.totalorder %s13, 1
    %p95 = por %p93, %p94
    %p96 = scmp.ne.s32.totalorder %s85, %s86
    %p97 = scmp.eq.s32.totalorder %s13, 0
    %p98 = por %p96, %p97
    %p99 = scmp.ne.s32.totalorder %s85, %s86
    %p100 = scmp.eq.s32.totalorder %s14, 1
    %p101 = por %p99, %p100
    %p103 = scmp.ne.s32.totalorder %s86, %s102
    %p104 = scmp.eq.s32.totalorder %s14, 0
    %p105 = por %p103, %p104
    %p106 = scmp.le.s32.totalorder 1, %s8
    %p107 = scmp.lt.s32.totalorder %s8, 3
    %p108 = pnand %p106, %p107
    %p109 = pneg %p108
    // Predicated region
    $region9: #{_lambda_.1} parent=5 // pred_check
      _
    $region10: #{_lambda_.1} parent=5 // pred_check_branch
      %111 = sbr.rel (%p108) target = $region12
    $region11: #{_lambda_.1} parent=5 // pred_region
      %s112 = ssub.s32 %s8, 1
      // Predicated region
      $region13: #{_lambda_.1} parent=11 // pred_check
        %p113 = pneg %p72
      $region14: #{_lambda_.1} parent=11 // pred_check_branch
        %115 = sbr.rel (%p113) target = $region16
      $region15: #{_lambda_.1} parent=11 // pred_region
        %s116 = smul.u32 2, %s18
        %p117 = scmp.lt.s32.totalorder %s116, 1
        %s118 = scalar_select %p117, %s116, 1
        %s119 = smul.addr %s118, 8
        %s120 = scalar_lea.vmem %s1, %s119
        %s121 = smul.u32 2, %s18
      $region16: #{_lambda_.1} parent=11 // pred_fallthru
        _
    $region12: #{_lambda_.1} parent=5 // pred_fallthru
      _
    %p122 = scmp.lt.s32.totalorder %s8, 2
    // Predicated region
    $region17: #{_lambda_.1} parent=5 // pred_check
      %p123 = pneg %p122
    $region18: #{_lambda_.1} parent=5 // pred_check_branch
      %125 = sbr.rel (%p123) target = $region20
    $region19: #{_lambda_.1} parent=5 // pred_region
      // Predicated region
      $region21: #{_lambda_.1} parent=19 // pred_check
        %p126 = pneg %p40
      $region22: #{_lambda_.1} parent=19 // pred_check_branch
        %128 = sbr.rel (%p126) target = $region24
      $region23: #{_lambda_.1} parent=19 // pred_region
        %p129 = scmp.lt.s32.totalorder %s15, 1
        %s130 = scalar_select %p129, %s15, 1
        %s131 = smul.addr %s130, 8
        %s132 = scalar_lea.vmem %s0, %s131
      $region24: #{_lambda_.1} parent=19 // pred_fallthru
        _
    $region20: #{_lambda_.1} parent=5 // pred_fallthru
      _
    %p133 = scmp.le.s32.totalorder 1, %s8
    %p134 = scmp.lt.s32.totalorder %s8, 3
    %p135 = pnand %p133, %p134
    %p136 = pneg %p135
    // Predicated region
    $region25: #{_lambda_.1} parent=5 // pred_check
      _
    $region26: #{_lambda_.1} parent=5 // pred_check_branch
      %138 = sbr.rel (%p135) target = $region28
    $region27: #{_lambda_.1} parent=5 // pred_region
      %s139 = ssub.s32 %s8, 1
      %p140 = scmp.lt.s32.totalorder %s17, 1
      %s141 = scalar_select %p140, %s17, 1
      %s142 = smul.addr %s141, 8
      %s143 = scalar_lea.vmem %s0, %s142
      %p144 = pneg %p46
      %p145 = pneg %p43
      %s146 = smul.u32 2, %s18
      %p147 = scmp.lt.s32.totalorder %s146, 1
      %s148 = scalar_select %p147, %s146, 1
      %s149 = smul.addr %s148, 8
      %s150 = scalar_lea.vmem %s1, %s149
      %p151 = pneg %p72
      %p152 = pneg %p69
      %p153 = pneg %p98
      %p154 = pneg %p95
      %p155 = scmp.lt.s32.totalorder %s17, 1
      %s156 = scalar_select %p155, %s17, 1
      %s157 = smul.addr %s156, 8
      %s158 = scalar_lea.vmem %s2, %s157
      %p159 = scmp.lt.s32.totalorder %s17, 1
      %s160 = scalar_select %p159, %s17, 1
      %s161 = smul.addr %s160, 8
      %s162 = scalar_lea.vmem %s0, %s161
      %s163 = smul.u32 2, %s18
      %p164 = scmp.lt.s32.totalorder %s163, 1
      %s165 = scalar_select %p164, %s163, 1
      %s166 = smul.addr %s165, 8
      %s167 = scalar_lea.vmem %s1, %s166
      %s168 = smul.u32 2, %s18
      %p169 = scmp.lt.s32.totalorder %s17, 1
      %s170 = scalar_select %p169, %s17, 1
      %s171 = smul.addr %s170, 8
      %s172 = scalar_lea.vmem %s2, %s171
      %p173 = scmp.eq.s32.totalorder %s18, 0
      // Predicated region
      $region29: #{_lambda_.1} parent=27 // pred_check
        %p174 = pneg %p173
      $region30: #{_lambda_.1} parent=27 // pred_check_branch
        %176 = sbr.rel (%p174) target = $region32
      $region31: #{_lambda_.1} parent=27 // pred_region
        %vm177 = vcmask 130048
        %178 = vst.msk [vmem:[#allocation2] sm:$0xff] %vm177, 0.0
      $region32: #{_lambda_.1} parent=27 // pred_fallthru
        _
      %v179 = vld [vmem:[%s162] sm:$0xff]
      %v180 = vld [vmem:[%s167] sm:$0xff]
      %v181 = vld [vmem:[%s167 + $0x8] sm:$0xff]
      %vm182 = vcmask 261120
      %v184 = vsel %vm182, %v179, 0
      %v187 = vsel %vm182, %v180, 0
      %v190 = vsel %vm182, %v181, 0
      %192 = vmatpush.xpose.msra.mxu0 0.0
      %193 = vmatpush.xpose.msra.mxu0 0.0
      %194 = vmatpush.xpose.msra.mxu0 0.0
      %195 = vmatpush.xpose.msra.mxu0 0.0
      %196 = vmatpush.xpose.msra.mxu0 0.0
      %197 = vmatpush.xpose.msra.mxu0 0.0
      %198 = vmatpush.xpose.msra.mxu0 0.0
      %199 = vmatpush.xpose.msra.mxu0 0.0
      %200 = vmatpush.xpose.msra.mxu0 0.0
      %201 = vmatpush.xpose.msra.mxu0 0.0
      %202 = vmatpush.xpose.msra.mxu0 0.0
      %203 = vmatpush.xpose.msra.mxu0 0.0
      %204 = vmatpush.xpose.msra.mxu0 0.0
      %205 = vmatpush.xpose.msra.mxu0 0.0
      %206 = vmatpush.xpose.msra.mxu0 %v190
      %207 = vmatpush.xpose.msra.mxu0 %v187
      %208 = vmatmul.f32.gmra.mxu0 %v184
      %v209 = vpop.f32.mrf.mxu0
      %v210 = vadd.f32 0.0, %v209
      %211 = vdwg.mxu0
      %v212 = vmul.f32 %v210, 1.442695
      %v213 = vpow.pop %v212
      %v214 = vld [vmem:[#allocation2] sm:$0xff]
      %v215 = vadd.f32 %v214, %v213
      %vm216 = vcmask 130048
      %217 = vst.msk [vmem:[#allocation2] sm:$0xff] %vm216, %v215
      // Predicated region
      $region33: #{_lambda_.1} parent=27 // pred_check
        %p218 = pneg %p173
      $region34: #{_lambda_.1} parent=27 // pred_check_branch
        %220 = sbr.rel (%p218) target = $region36
      $region35: #{_lambda_.1} parent=27 // pred_region
        %v221 = vld [vmem:[#allocation2] sm:$0xff]
        %v222 = vsel %vm216, %v221, 0.0
        %223 = vadd.xlane.f32.xlu0 %v222
        %v224 = vpop.xlane.xlu0 %223
        %v225 = vsub.f32 %v224, 7.389056
        %v226 = vlog2.pop %v225
        %v227 = vmul.f32 %v226, 0.6931472
        %vm228 = vcmask 7168
        %229 = vst.msk [vmem:[%s172] sm:$0xff] %vm228, %v227
      $region36: #{_lambda_.1} parent=27 // pred_fallthru
        _
      %p230 = scmp.lt.s32.totalorder %s17, 1
      %s231 = scalar_select %p230, %s17, 1
      %s232 = smul.addr %s231, 8
      %s233 = scalar_lea.vmem %s2, %s232
      // Predicated region
      $region37: #{_lambda_.1} parent=27 // pred_check
        %p234 = pneg %p95
      $region38: #{_lambda_.1} parent=27 // pred_check_branch
        %236 = sbr.rel (%p234) target = $region40
      $region39: #{_lambda_.1} parent=27 // pred_region
        _
      $region40: #{_lambda_.1} parent=27 // pred_fallthru
        _
    $region28: #{_lambda_.1} parent=5 // pred_fallthru
      _
    %p237 = scmp.le.s32.totalorder 2, %s8
    // Predicated region
    $region41: #{_lambda_.1} parent=5 // pred_check
      %p238 = pneg %p237
    $region42: #{_lambda_.1} parent=5 // pred_check_branch
      %240 = sbr.rel (%p238) target = $region44
    $region43: #{_lambda_.1} parent=5 // pred_region
      %s241 = ssub.s32 %s8, 2
      // Predicated region
      $region45: #{_lambda_.1} parent=43 // pred_check
        %p242 = pneg %p101
      $region46: #{_lambda_.1} parent=43 // pred_check_branch
        %244 = sbr.rel (%p242) target = $region48
      $region47: #{_lambda_.1} parent=43 // pred_region
        %p245 = scmp.lt.s32.totalorder %s19, 1
        %s246 = scalar_select %p245, %s19, 1
        %s247 = smul.addr %s246, 8
        %s248 = scalar_lea.vmem %s2, %s247
      $region48: #{_lambda_.1} parent=43 // pred_fallthru
        _
    $region44: #{_lambda_.1} parent=5 // pred_fallthru
      _
  $region6: #{_lambda_.1} parent=0 // loop_footer
    %s12 = sadd.s32 1, %s8
  $region7: #{_lambda_.1} parent=0 // loop_footer_branch
    %7 = sbr.rel target = $region3
  $region8: #{_lambda_.1} parent=0 // loop_exit
    _

</llo_original>
